<compile_context>
chip_gen: v5e
topology: v5e:2x2
jax: 0.10.0
libtpu: 0.0.40
codegen_flags: <defaults>
</compile_context>

<pallas_src>
import functools

import jax
import jax.numpy as jnp
from jax.experimental import pallas as pl
from jax.experimental.pallas import tpu as pltpu


_VMEM_LIMIT = 64 * 1024 * 1024


def _pick_tile(n, candidates, need_two=False):
    """Largest candidate that divides n (optionally leaving >=2 tiles), else n."""
    for c in candidates:
        if n % c == 0 and (not need_two or 2 * c <= n):
            return c
    return n


# -----------------------------------------------------------------------------
# Kernel 1: qkv 1x1 conv (+ folded BN + ReLU), with the NCHW -> pixel-major
# transpose fused (LHS is read channel-major and contracted on its leading dim).
# -----------------------------------------------------------------------------
def _qkv_conv_kernel(x_ref, w_ref, b_ref, o_ref):
    # x_ref: (1, Cin, tn) bf16 ; w_ref: (Cin, C3) bf16 ; b_ref: (1, C3) f32
    acc = jax.lax.dot_general(x_ref[0], w_ref[...],
                              (((0,), (0,)), ((), ())),
                              preferred_element_type=jnp.float32)     # (tn, C3)
    acc = jnp.maximum(acc + b_ref[...], 0.0)
    o_ref[0] = acc.astype(o_ref.dtype)


def qkv_pointwise_conv(x_bcn, w, bias, out_dtype):
    """x_bcn: (B, Cin, N) -> relu(x^T @ w + bias): (B, N, C3)."""
    B, Cin, N = x_bcn.shape
    C3 = w.shape[1]
    tn = _pick_tile(N, (1024, 512, 256, 128))
    return pl.pallas_call(
        _qkv_conv_kernel,
        out_shape=jax.ShapeDtypeStruct((B, N, C3), out_dtype),
        grid=(B, N // tn),
        in_specs=[
            pl.BlockSpec((1, Cin, tn), lambda b, n: (b, 0, n)),
            pl.BlockSpec((Cin, C3), lambda b, n: (0, 0)),
            pl.BlockSpec((1, C3), lambda b, n: (0, 0)),
        ],
        out_specs=pl.BlockSpec((1, tn, C3), lambda b, n: (b, n, 0)),
        compiler_params=pltpu.CompilerParams(
            dimension_semantics=("parallel", "parallel"),
            vmem_limit_bytes=_VMEM_LIMIT),
    )(x_bcn, w, bias)


# -----------------------------------------------------------------------------
# Kernel 2: depthwise 5x5 conv ("same" padding), NHWC, channels on lanes.
#   Grid is (B, H_tiles); only halo strips are zeroed/copied into a small
#   scratch held in the input dtype; the f32 accumulator is one row tile.
# -----------------------------------------------------------------------------
def _dw_conv5x5_kernel(x_ref, w_ref, o_ref, pad_ref, *, W, tile_h):
    i = pl.program_id(1)
    C = o_ref.shape[-1]
    r0 = i * tile_h
    zrow = jnp.zeros((2, W, C), pad_ref.dtype)
    zcol = jnp.zeros((tile_h + 4, 2, C), pad_ref.dtype)

    # Left/right column halo (always zero) -- tiny strips only.
    pad_ref[:, 0:2, :] = zcol
    pad_ref[:, W + 2:W + 4, :] = zcol
    # Body rows of this tile.
    pad_ref[2:2 + tile_h, 2:2 + W, :] = x_ref[0, pl.ds(r0, tile_h), :, :]

    # Top halo: zeros at the image border, otherwise the 2 rows above the tile.
    @pl.when(i == 0)
    def _():
        pad_ref[0:2, 2:2 + W, :] = zrow

    @pl.when(i > 0)
    def _():
        pad_ref[0:2, 2:2 + W, :] = x_ref[0, pl.ds(r0 - 2, 2), :, :]

    last = pl.num_programs(1) - 1

    # Bottom halo.
    @pl.when(i == last)
    def _():
        pad_ref[tile_h + 2:tile_h + 4, 2:2 + W, :] = zrow

    @pl.when(i < last)
    def _():
        pad_ref[tile_h + 2:tile_h + 4, 2:2 + W, :] = x_ref[0, pl.ds(r0 + tile_h, 2), :, :]

    w = w_ref[...].astype(jnp.float32)                    # (25, C)
    acc = jnp.zeros((tile_h, W, C), jnp.float32)          # bounded: one row tile
    for kh in range(5):                                   # 25 taps, statically unrolled
        for kw in range(5):
            acc = acc + (pad_ref[kh:kh + tile_h, kw:kw + W, :].astype(jnp.float32)
                         * w[kh * 5 + kw])
    o_ref[0] = acc.astype(o_ref.dtype)


def depthwise_conv5x5(x_nhwc, w25c):
    """x_nhwc: (B, H, W, C) bf16, w25c: (25, C) f32 -> (B, H, W, C) bf16."""
    B, H, W, C = x_nhwc.shape
    tile_h = _pick_tile(H, (8,))
    # TODO(synk): for very large H*W*C also tile the *input* rows with an
    # explicit 2-row halo (manual DMA) instead of keeping the whole bf16 image
    # resident per batch; at bf16 even 64x64x768 is ~6 MiB so residency is fine.
    return pl.pallas_call(
        functools.partial(_dw_conv5x5_kernel, W=W, tile_h=tile_h),
        out_shape=jax.ShapeDtypeStruct((B, H, W, C), x_nhwc.dtype),
        grid=(B, H // tile_h),
        in_specs=[
            pl.BlockSpec((1, H, W, C), lambda b, i: (b, 0, 0, 0)),
            pl.BlockSpec((25, C), lambda b, i: (0, 0)),
        ],
        out_specs=pl.BlockSpec((1, tile_h, W, C), lambda b, i: (b, i, 0, 0)),
        scratch_shapes=[pltpu.VMEM((tile_h + 4, W + 4, C), x_nhwc.dtype)],
        compiler_params=pltpu.CompilerParams(
            dimension_semantics=("parallel", "parallel"),
            vmem_limit_bytes=_VMEM_LIMIT),
    )(x_nhwc, w25c)


# -----------------------------------------------------------------------------
# Kernels 3a/3b: ReLU linear attention, N-tiled, with the grouped 1x1 conv,
# channel concat, head routing and the proj 1x1 conv all fused.
#
#   Pass A (reduce over N, "arbitrary" axis):
#       K_all = relu(qkv @ SK + dw @ GK) ; V_all = qkv @ SV + dw @ GV
#       M    += K_all^T @ [V_all | 1]                   (D_all, D_all+1), f32
#   Pass B (fully parallel):
#       Q_all = relu(qkv @ SQ + dw @ GQ)
#       num   = Q_all @ (M[:, :D] * head_mask)
#       den   = Q_all @ (M[:, D:] * head_mask)          (per-head k column sums)
#       att   = num * reciprocal(den + eps)             (f32 divide path)
#       out   = relu(att @ W_proj + b_proj)             (proj + BN + ReLU fused)
# -----------------------------------------------------------------------------
def _kv_reduce_kernel(qkv_ref, dw_ref, sk_ref, gk_ref, sv_ref, gv_ref, m_ref):
    n = pl.program_id(1)
    qkv = qkv_ref[0]                                      # (tn, C3) bf16
    dw = dw_ref[0]                                        # (tn, C3) bf16
    k = jnp.maximum(
        jnp.dot(qkv, sk_ref[...], preferred_element_type=jnp.float32)
        + jnp.dot(dw, gk_ref[...], preferred_element_type=jnp.float32), 0.0)
    v = (jnp.dot(qkv, sv_ref[...], preferred_element_type=jnp.float32)
         + jnp.dot(dw, gv_ref[...], preferred_element_type=jnp.float32))
    ones = jnp.ones((v.shape[0], 1), jnp.float32)
    v1 = jnp.concatenate([v, ones], axis=-1)              # (tn, D_all + 1)
    # TODO(synk): this computes the full (D_all, D_all) gram and masks it later;
    # at very large head counts a head-batched contraction would save MXU FLOPs.
    m_tile = jax.lax.dot_general(
        k.astype(jnp.bfloat16), v1.astype(jnp.bfloat16),
        (((0,), (0,)), ((), ())),
        preferred_element_type=jnp.float32)                # (D_all, D_all+1) f32

    @pl.when(n == 0)
    def _():
        m_ref[0] = m_tile

    @pl.when(n > 0)
    def _():
        m_ref[0] = m_ref[0] + m_tile


def _att_apply_kernel(qkv_ref, dw_ref, sq_ref, gq_ref, m_ref, wp_ref, bp_ref,
                      o_ref, *, dim, eps):
    qkv = qkv_ref[0]                                      # (tn, C3) bf16
    dw = dw_ref[0]                                        # (tn, C3) bf16
    q = jnp.maximum(
        jnp.dot(qkv, sq_ref[...], preferred_element_type=jnp.float32)
        + jnp.dot(dw, gq_ref[...], preferred_element_type=jnp.float32), 0.0)

    m = m_ref[0]                                          # (D, D+1) f32
    D = m.shape[0]
    row = jax.lax.broadcasted_iota(jnp.int32, (D, D), 0) // dim
    col = jax.lax.broadcasted_iota(jnp.int32, (D, D), 1) // dim
    head_mask = (row == col).astype(jnp.float32)          # block-diagonal heads
    kv_bd = m[:, :D] * head_mask                          # per-head K^T V blocks
    ks_bd = m[:, D:D + 1] * head_mask                     # per-head k column sums

    qb = q.astype(jnp.bfloat16)
    num = jnp.dot(qb, kv_bd.astype(jnp.bfloat16), preferred_element_type=jnp.float32)
    den = jnp.dot(qb, ks_bd.astype(jnp.bfloat16), preferred_element_type=jnp.float32)
    att = num * pl.reciprocal(den + eps, approx=True)     # f32 divide path (EUP)

    out = jnp.dot(att.astype(jnp.bfloat16), wp_ref[...],
                  preferred_element_type=jnp.float32)
    out = jnp.maximum(out + bp_ref[...], 0.0)             # proj BN bias + ReLU
    o_ref[0] = out.astype(o_ref.dtype)


def lite_mla_attention(qkv_bnc, dw_bnc, sel_q, sel_k, sel_v, grp_q, grp_k, grp_v,
                       w_proj, b_proj, dim, eps, out_dtype):
    B, N, C3 = qkv_bnc.shape
    D_all = sel_q.shape[1]
    Cout = w_proj.shape[1]
    tn = _pick_tile(N, (512, 256, 128), need_two=True)
    grid = (B, N // tn)

    m = pl.pallas_call(
        _kv_reduce_kernel,
        out_shape=jax.ShapeDtypeStruct((B, D_all, D_all + 1), jnp.float32),
        grid=grid,
        in_specs=[
            pl.BlockSpec((1, tn, C3), lambda b, n: (b, n, 0)),
            pl.BlockSpec((1, tn, C3), lambda b, n: (b, n, 0)),
            pl.BlockSpec((C3, D_all), lambda b, n: (0, 0)),
            pl.BlockSpec((C3, D_all), lambda b, n: (0, 0)),
            pl.BlockSpec((C3, D_all), lambda b, n: (0, 0)),
            pl.BlockSpec((C3, D_all), lambda b, n: (0, 0)),
        ],
        out_specs=pl.BlockSpec((1, D_all, D_all + 1), lambda b, n: (b, 0, 0)),
        compiler_params=pltpu.CompilerParams(
            dimension_semantics=("parallel", "arbitrary"),
            vmem_limit_bytes=_VMEM_LIMIT),
    )(qkv_bnc, dw_bnc, sel_k, grp_k, sel_v, grp_v)

    return pl.pallas_call(
        functools.partial(_att_apply_kernel, dim=dim, eps=eps),
        out_shape=jax.ShapeDtypeStruct((B, N, Cout), out_dtype),
        grid=grid,
        in_specs=[
            pl.BlockSpec((1, tn, C3), lambda b, n: (b, n, 0)),
            pl.BlockSpec((1, tn, C3), lambda b, n: (b, n, 0)),
            pl.BlockSpec((C3, D_all), lambda b, n: (0, 0)),
            pl.BlockSpec((C3, D_all), lambda b, n: (0, 0)),
            pl.BlockSpec((1, D_all, D_all + 1), lambda b, n: (b, 0, 0)),
            pl.BlockSpec((D_all, Cout), lambda b, n: (0, 0)),
            pl.BlockSpec((1, Cout), lambda b, n: (0, 0)),
        ],
        out_specs=pl.BlockSpec((1, tn, Cout), lambda b, n: (b, n, 0)),
        compiler_params=pltpu.CompilerParams(
            dimension_semantics=("parallel", "parallel"),
            vmem_limit_bytes=_VMEM_LIMIT),
    )(qkv_bnc, dw_bnc, sel_q, grp_q, m, w_proj, b_proj)


# -----------------------------------------------------------------------------
# Host-side derived weights: lane-dense head-routing / grouped-conv matrices.
#   SQ/SK/SV: (C3, D_all) 0/1 selections of the raw-branch q/k/v channels.
#   GQ/GK/GV: (C3, D_all) grouped 1x1 conv weights routed to the ms-branch heads
#             (2D lane-friendly block-diagonal form of the (3*heads, d, d) weight).
# -----------------------------------------------------------------------------
def _build_head_matrices(w_group, heads, dim):
    C3 = 3 * heads * dim
    D_all = 2 * heads * dim
    eye = jnp.eye(dim, dtype=jnp.float32)
    z = jnp.zeros((C3, D_all), jnp.float32)
    sel_q, sel_k, sel_v = z, z, z
    grp_q, grp_k, grp_v = z, z, z
    for h in range(heads):
        src = 3 * dim * h
        raw_dst = dim * h
        ms_dst = dim * (heads + h)
        sel_q = sel_q.at[src:src + dim, raw_dst:raw_dst + dim].set(eye)
        sel_k = sel_k.at[src + dim:src + 2 * dim, raw_dst:raw_dst + dim].set(eye)
        sel_v = sel_v.at[src + 2 * dim:src + 3 * dim, raw_dst:raw_dst + dim].set(eye)
        grp_q = grp_q.at[src:src + dim, ms_dst:ms_dst + dim].set(w_group[3 * h])
        grp_k = grp_k.at[src + dim:src + 2 * dim, ms_dst:ms_dst + dim].set(w_group[3 * h + 1])
        grp_v = grp_v.at[src + 2 * dim:src + 3 * dim, ms_dst:ms_dst + dim].set(w_group[3 * h + 2])
    return sel_q, sel_k, sel_v, grp_q, grp_k, grp_v


# -----------------------------------------------------------------------------
# Parameter construction (deterministic, synthetic)
# -----------------------------------------------------------------------------
def make_params(key, in_channels, out_channels, dim):
    heads = in_channels // dim
    total_dim = heads * dim
    C3 = 3 * total_dim
    proj_cin = 2 * total_dim  # total_dim * (1 + len(scales)), scales=(5,)

    ks = jax.random.split(key, 16)

    def bn_fold(kg, kb, km, kv, C):
        gamma = 1.0 + 0.1 * jax.random.normal(kg, (C,), jnp.float32)
        beta = 0.1 * jax.random.normal(kb, (C,), jnp.float32)
        mean = 0.05 * jax.random.normal(km, (C,), jnp.float32)
        var = 1.0 + 0.1 * jnp.abs(jax.random.normal(kv, (C,), jnp.float32))
        scale = gamma / jnp.sqrt(var + 1e-5)
        bias = beta - mean * scale
        return scale, bias

    # qkv: Conv2d(in_channels, 3*total_dim, 1, bias=False) + BN + ReLU
    w_qkv = 0.1 * jax.random.normal(ks[0], (in_channels, C3), jnp.float32)
    qkv_scale, qkv_bias = bn_fold(ks[1], ks[2], ks[3], ks[4], C3)

    # aggreg[0][0]: depthwise Conv2d(C3, C3, 5, groups=C3, bias=False) -> (25, C3)
    w_dw = 0.05 * jax.random.normal(ks[5], (25, C3), jnp.float32)

    # aggreg[0][1]: Conv2d(C3, C3, 1, groups=3*heads, bias=False); each group g
    # applies x_g @ w_group[g] with w_group[g]: (dim_in, dim_out).
    w_group = 0.1 * jax.random.normal(ks[6], (3 * heads, dim, dim), jnp.float32)

    # proj: Conv2d(2*total_dim, out_channels, 1, bias=False) + BN + ReLU
    w_proj = 0.1 * jax.random.normal(ks[7], (proj_cin, out_channels), jnp.float32)
    proj_scale, proj_bias = bn_fold(ks[8], ks[9], ks[10], ks[11], out_channels)

    return {
        "dim": dim,
        "eps": 1e-15,
        "w_qkv": w_qkv, "qkv_scale": qkv_scale, "qkv_bias": qkv_bias,
        "w_dw": w_dw,
        "w_group": w_group,
        "w_proj": w_proj, "proj_scale": proj_scale, "proj_bias": proj_bias,
    }


# -----------------------------------------------------------------------------
# Full LiteMLA forward
# -----------------------------------------------------------------------------
def lite_mla_forward(x_nchw, params):
    B, Cin, H, W = x_nchw.shape
    N = H * W
    dim = params["dim"]
    eps = params["eps"]
    cdt = jnp.bfloat16                       # activation carry / MXU operand dtype

    C3 = params["w_qkv"].shape[1]
    heads = C3 // (3 * dim)
    Cout = params["w_proj"].shape[1]

    # Fold BN scale into the 1x1 conv weights (tiny host-side ops).
    w_qkv_eff = (params["w_qkv"] * params["qkv_scale"][None, :]).astype(cdt)
    b_qkv = params["qkv_bias"].reshape(1, C3).astype(jnp.float32)
    w_proj_eff = (params["w_proj"] * params["proj_scale"][None, :]).astype(cdt)
    b_proj = params["proj_bias"].reshape(1, Cout).astype(jnp.float32)

    # Lane-dense head routing + grouped-conv matrices (2D block-diagonal forms).
    mats = _build_head_matrices(params["w_group"], heads, dim)
    sel_q, sel_k, sel_v, grp_q, grp_k, grp_v = [m.astype(cdt) for m in mats]

    # NCHW -> (B, Cin, N) is just a reshape; the transpose is fused into the
    # qkv conv kernel (dot_general contracts the leading Cin axis).
    x_bcn = x_nchw.astype(cdt).reshape(B, Cin, N)

    # qkv: 1x1 conv + folded BN + ReLU -> (B, N, C3) bf16, pixel-major.
    qkv_bnc = qkv_pointwise_conv(x_bcn, w_qkv_eff, b_qkv, cdt)

    # multi-scale branch: depthwise 5x5 (H-tiled, halo built in-kernel).
    dw_nhwc = depthwise_conv5x5(qkv_bnc.reshape(B, H, W, C3),
                                params["w_dw"].astype(jnp.float32))

    # fused grouped-1x1-conv + concat + ReLU linear attention + proj(+BN+ReLU).
    # TODO(synk): relu_quadratic_att branch (H*W <= dim) not implemented.
    out_bnc = lite_mla_attention(qkv_bnc, dw_nhwc.reshape(B, N, C3),
                                 sel_q, sel_k, sel_v, grp_q, grp_k, grp_v,
                                 w_proj_eff, b_proj, dim, eps, cdt)   # (B, N, Cout)

    # pixel-major -> NCHW (left to XLA; fused with the f32 up-cast).
    return jnp.transpose(out_bnc.astype(jnp.float32).reshape(B, H, W, Cout),
                         (0, 3, 1, 2))


if __name__ == "__main__":
    key = jax.random.PRNGKey(0)
    kx, kp = jax.random.split(key)

    B, Cin, H, W = 2, 16, 16, 16     # in_channels=16, dim=8 -> heads=2, total_dim=16
    Cout, dim = 16, 8

    x = jax.random.normal(kx, (B, Cin, H, W), jnp.float32)
    params = make_params(kp, Cin, Cout, dim)

    out = lite_mla_forward(x, params)
    out = jax.block_until_ready(out)
    assert out.shape == (B, Cout, H, W)
    assert bool(jnp.all(jnp.isfinite(out)))
    print("KERNEL_OK")
</pallas_src>

<mosaic_0001>
module attributes {stable_mosaic.version = 11 : i64} {
  func.func @_qkv_conv_kernel(%arg0: i32, %arg1: i32, %arg2: memref<1x16x256xbf16, #tpu.memory_space<vmem>>, %arg3: memref<16x48xbf16, #tpu.memory_space<vmem>>, %arg4: memref<1x48xf32, #tpu.memory_space<vmem>>, %arg5: memref<1x256x48xbf16, #tpu.memory_space<vmem>>) attributes {dimension_semantics = [#tpu.dimension_semantics<parallel>, #tpu.dimension_semantics<parallel>], iteration_bounds = array<i64: 2, 1>, scalar_prefetch = 0 : i64, scratch_operands = 0 : i64, tpu.core_type = #tpu.core_type<tc>, window_params = [{transform_indices = @transform_0, window_bounds = array<i64: 1, 16, 256>}, {pipeline_mode = #tpu.pipeline_mode<synchronous>, transform_indices = @transform_1, window_bounds = array<i64: 16, 48>}, {pipeline_mode = #tpu.pipeline_mode<synchronous>, transform_indices = @transform_2, window_bounds = array<i64: 1, 48>}, {transform_indices = @transform_3, window_bounds = array<i64: 1, 256, 48>}]} {
    %c0 = arith.constant 0 : index
    %c0_0 = arith.constant 0 : index
    %c0_1 = arith.constant 0 : index
    %0 = vector.load %arg2[%c0, %c0_0, %c0_1] : memref<1x16x256xbf16, #tpu.memory_space<vmem>>, vector<1x16x256xbf16>
    %1 = vector.shape_cast %0 : vector<1x16x256xbf16> to vector<16x256xbf16>
    %c0_2 = arith.constant 0 : index
    %c0_3 = arith.constant 0 : index
    %2 = vector.load %arg3[%c0_2, %c0_3] : memref<16x48xbf16, #tpu.memory_space<vmem>>, vector<16x48xbf16>
    %cst = arith.constant dense<0.000000e+00> : vector<256x48xf32>
    %3 = tpu.matmul %1, %2, %cst {dimension_numbers = #tpu.dot_dimension_numbers<[0], [0], [1], [1], [0, 1, 1, 1], [], []>} : vector<16x256xbf16>, vector<16x48xbf16>, vector<256x48xf32> -> vector<256x48xf32>
    %c0_4 = arith.constant 0 : index
    %c0_5 = arith.constant 0 : index
    %4 = vector.load %arg4[%c0_4, %c0_5] : memref<1x48xf32, #tpu.memory_space<vmem>>, vector<1x48xf32>
    %5 = vector.broadcast %4 : vector<1x48xf32> to vector<256x48xf32>
    %6 = arith.addf %3, %5 : vector<256x48xf32>
    %cst_6 = arith.constant 0.000000e+00 : f32
    %7 = vector.broadcast %cst_6 : f32 to vector<256x48xf32>
    %8 = arith.maximumf %6, %7 : vector<256x48xf32>
    %9 = arith.truncf %8 : vector<256x48xf32> to vector<256x48xbf16>
    %c0_7 = arith.constant 0 : index
    %c0_8 = arith.constant 0 : index
    %c0_9 = arith.constant 0 : index
    %10 = vector.load %arg5[%c0_7, %c0_8, %c0_9] : memref<1x256x48xbf16, #tpu.memory_space<vmem>>, vector<1x256x48xbf16>
    %11 = vector.shape_cast %10 : vector<1x256x48xbf16> to vector<256x48xbf16>
    %12 = vector.shape_cast %9 : vector<256x48xbf16> to vector<1x256x48xbf16>
    tpu.vector_store %arg5[%c0_7, %c0_8, %c0_9], %12 {strides = array<i32>} : memref<1x256x48xbf16, #tpu.memory_space<vmem>>, vector<1x256x48xbf16>,
    return
  }
  func.func @transform_0(%arg0: i32, %arg1: i32) -> (i32, i32, i32) {
    %c0_i32 = arith.constant 0 : i32
    %c0_i32_0 = arith.constant 0 : i32
    return %arg0, %c0_i32, %arg1 : i32, i32, i32
  }
  func.func @transform_1(%arg0: i32, %arg1: i32) -> (i32, i32) {
    %c0_i32 = arith.constant 0 : i32
    %c0_i32_0 = arith.constant 0 : i32
    %c0_i32_1 = arith.constant 0 : i32
    return %c0_i32, %c0_i32_0 : i32, i32
  }
  func.func @transform_2(%arg0: i32, %arg1: i32) -> (i32, i32) {
    %c0_i32 = arith.constant 0 : i32
    %c0_i32_0 = arith.constant 0 : i32
    %c0_i32_1 = arith.constant 0 : i32
    return %c0_i32, %c0_i32_0 : i32, i32
  }
  func.func @transform_3(%arg0: i32, %arg1: i32) -> (i32, i32, i32) {
    %c0_i32 = arith.constant 0 : i32
    %c0_i32_0 = arith.constant 0 : i32
    return %arg0, %arg1, %c0_i32 : i32, i32, i32
  }
}

</mosaic_0001>

<llo_original>
// kernel: tpu_custom_call.1
$region0: #{tpu_custom_call.1}
  #allocation0 [shape = 'u32[]', space=smem, size = 0x4, offset = 0x4, fixed_abs, tag = 'smem constant byte address 0x4 - core index']
  #allocation1 [shape = 'u32[72,128]{1,0:T(1,128)}', space=vmem, size = 0x9000, scoped, tag = 'internal scratch']
  %s0 = inlined_call_operand.hbm [shape: bf16[2,16,256], index: 0, kind: input, shape index: {}]
  %s1 = inlined_call_operand.hbm [shape: bf16[16,48], index: 1, kind: input, shape index: {}]
  %s2 = inlined_call_operand.vmem [shape: f32[1,48], index: 2, kind: input, shape index: {}]
  %s3 = inlined_call_operand.vmem [shape: bf16[2,256,48], index: 3, kind: output, shape index: {}]
  %s4 = sld [smem:[#allocation0]]
  $region53: #{tpu_custom_call.1} parent=0
    _
  %s6 = ssub.s32 1, %s4
  %s7 = scalar_select 0, %s6, %s4
  $region1: #{tpu_custom_call.1} parent=0
    #allocation2 [shape = 'u8[16384]{0}', space=vmem, size = 0x4000, scoped, tag = 'input window, operand 0']
    #allocation3 [shape = 's32[2]{0}', space=sflag, size = 0x8, scoped, tag = 'scoped memory for tpu_custom_call.1']
    #allocation4 [shape = 'u8[4096]{0}', space=vmem, size = 0x1000, scoped, tag = 'input window, operand 1, single buffered']
    #allocation5 [shape = 's32[1]{0}', space=sflag, size = 0x4, scoped, tag = 'scoped memory for tpu_custom_call.1']
    %8 = vsyncpa [#allocation3], 0
    %s9 = scalar_lea.sflag [#allocation3], 1
    %10 = vsyncpa %s9, 0
    %11 = vsyncpa [#allocation5], 0
    loop: start=0, step=1, limit=4
    $region2: #{tpu_custom_call.1} parent=1 // loop_pre_header
      _
    $region3: #{tpu_custom_call.1} parent=1 // loop_header
      %s13 = sphi 0, %s17
      %p14 = scmp.ge.s32.totalorder %s13, 4
      %s20 = sphi 0, %s32
      %s21 = sphi 0, %s28
      %s22 = sphi 0, %s20
      %s23 = sphi 0, %s21
      %s24 = sphi 0, %s22
      %s25 = sphi 0, %s23
      %s37 = sphi 0, %s39
      %s40 = sphi 0, %s37
      %s41 = sphi 0, %s40
      %s57 = sphi 0, %s41
      %s61 = sphi 0, %s61
      %s63 = sphi 0, %s61
      %s64 = sphi 0, %s63
      %s78 = sphi 0, %s64
      %s82 = sphi 0, %s82
      %s84 = sphi 0, %s82
      %s85 = sphi 0, %s84
      %s99 = sphi 0, %s85
      %s107 = sphi 0, %s109
      %s110 = sphi 0, %s107
      %s111 = sphi 0, %s110
      %s127 = sphi 0, %s111
    $region4: #{tpu_custom_call.1} parent=1 // loop_header_branch
      %16 = sbr.rel (%p14) target = $region8
    $region5: #{tpu_custom_call.1} parent=1 // loop_body
      %s18 = ssub.s32 %s13, 1
      %s19 = ssub.s32 %s13, 2
      %s26 = sadd.s32 1, %s21
      %p27 = scmp.ge.s32.totalorder %s26, 1
      %s28 = scalar_select %p27, 0, %s26
      %s29 = sadd.s32 1, %s20
      %s30 = scalar_select %p27, %s29, %s20
      %p31 = scmp.ge.s32.totalorder %s30, 2
      %s32 = scalar_select %p31, 0, %s30
      %s33 = ssub.s32 %s20, %s32
      %s34 = ssub.s32 %s21, %s28
      %s35 = sor.u32 %s33, %s34
      %p36 = scmp.eq.s32.totalorder %s35, 0
      %s38 = sadd.s32 %s37, 1
      %s39 = scalar_select %p36, %s37, %s38
      %p42 = pneg %p36
      %p43 = scmp.eq.s32.totalorder %s13, 1
      %p44 = por %p42, %p43
      %p45 = scmp.ne.s32.totalorder %s37, %s40
      %p46 = scmp.eq.s32.totalorder %s13, 0
      %p47 = por %p45, %p46
      %p48 = scmp.ne.s32.totalorder %s37, %s40
      %p49 = scmp.eq.s32.totalorder %s18, 1
      %p50 = por %p48, %p49
      %p51 = scmp.ne.s32.totalorder %s40, %s41
      %p52 = scmp.eq.s32.totalorder %s18, 0
      %p53 = por %p51, %p52
      %p54 = scmp.ne.s32.totalorder %s40, %s41
      %p55 = scmp.eq.s32.totalorder %s19, 1
      %p56 = por %p54, %p55
      %p58 = scmp.ne.s32.totalorder %s41, %s57
      %p59 = scmp.eq.s32.totalorder %s19, 0
      %p60 = por %p58, %p59
      %s62 = sadd.s32 %s61, 1
      %p65 = scmp.eq.s32.totalorder %s13, 1
      %p66 = scmp.ne.s32.totalorder %s61, %s63
      %p67 = scmp.eq.s32.totalorder %s13, 0
      %p68 = por %p66, %p67
      %p69 = scmp.ne.s32.totalorder %s61, %s63
      %p70 = scmp.eq.s32.totalorder %s18, 1
      %p71 = por %p69, %p70
      %p72 = scmp.ne.s32.totalorder %s63, %s64
      %p73 = scmp.eq.s32.totalorder %s18, 0
      %p74 = por %p72, %p73
      %p75 = scmp.ne.s32.totalorder %s63, %s64
      %p76 = scmp.eq.s32.totalorder %s19, 1
      %p77 = por %p75, %p76
      %p79 = scmp.ne.s32.totalorder %s64, %s78
      %p80 = scmp.eq.s32.totalorder %s19, 0
      %p81 = por %p79, %p80
      %s83 = sadd.s32 %s82, 1
      %p86 = scmp.eq.s32.totalorder %s13, 1
      %p87 = scmp.ne.s32.totalorder %s82, %s84
      %p88 = scmp.eq.s32.totalorder %s13, 0
      %p89 = por %p87, %p88
      %p90 = scmp.ne.s32.totalorder %s82, %s84
      %p91 = scmp.eq.s32.totalorder %s18, 1
      %p92 = por %p90, %p91
      %p93 = scmp.ne.s32.totalorder %s84, %s85
      %p94 = scmp.eq.s32.totalorder %s18, 0
      %p95 = por %p93, %p94
      %p96 = scmp.ne.s32.totalorder %s84, %s85
      %p97 = scmp.eq.s32.totalorder %s19, 1
      %p98 = por %p96, %p97
      %p100 = scmp.ne.s32.totalorder %s85, %s99
      %p101 = scmp.eq.s32.totalorder %s19, 0
      %p102 = por %p100, %p101
      %s103 = ssub.s32 %s20, %s32
      %s104 = ssub.s32 %s21, %s28
      %s105 = sor.u32 %s103, %s104
      %p106 = scmp.eq.s32.totalorder %s105, 0
      %s108 = sadd.s32 %s107, 1
      %s109 = scalar_select %p106, %s107, %s108
      %p112 = pneg %p106
      %p113 = scmp.eq.s32.totalorder %s13, 1
      %p114 = por %p112, %p113
      %p115 = scmp.ne.s32.totalorder %s107, %s110
      %p116 = scmp.eq.s32.totalorder %s13, 0
      %p117 = por %p115, %p116
      %p118 = scmp.ne.s32.totalorder %s107, %s110
      %p119 = scmp.eq.s32.totalorder %s18, 1
      %p120 = por %p118, %p119
      %p121 = scmp.ne.s32.totalorder %s110, %s111
      %p122 = scmp.eq.s32.totalorder %s18, 0
      %p123 = por %p121, %p122
      %p124 = scmp.ne.s32.totalorder %s110, %s111
      %p125 = scmp.eq.s32.totalorder %s19, 1
      %p126 = por %p124, %p125
      %p128 = scmp.ne.s32.totalorder %s111, %s127
      %p129 = scmp.eq.s32.totalorder %s19, 0
      %p130 = por %p128, %p129
      %p131 = scmp.le.s32.totalorder 1, %s13
      %p132 = scmp.lt.s32.totalorder %s13, 3
      %p133 = pnand %p131, %p132
      %p134 = pneg %p133
      // Predicated region
      $region9: #{tpu_custom_call.1} parent=5 // pred_check
        _
      $region10: #{tpu_custom_call.1} parent=5 // pred_check_branch
        %136 = sbr.rel (%p133) target = $region12
      $region11: #{tpu_custom_call.1} parent=5 // pred_region
        %s137 = ssub.s32 %s13, 1
        // Predicated region
        $region13: #{tpu_custom_call.1} parent=11 // pred_check
          %p138 = pneg %p74
        $region14: #{tpu_custom_call.1} parent=11 // pred_check_branch
          %140 = sbr.rel (%p138) target = $region16
        $region15: #{tpu_custom_call.1} parent=11 // pred_region
          %142 = vsyncadd [#allocation5], 0
          %s143 = sshll.u32 %s1, 4
          %s144 = int_to_ptr.hbm [resolvable:$true] %s143
          %s145 = sshll.u32 [#allocation4], 4
          %s146 = int_to_ptr.vmem [resolvable:$true] %s145
          %151 = dma.hbm_to_vmem [thread:$0]  %s144, 128, %s146, [#allocation5], 64, 64, 4
        $region16: #{tpu_custom_call.1} parent=11 // pred_fallthru
          _
        // Predicated region
        $region17: #{tpu_custom_call.1} parent=11 // pred_check
          %p152 = pneg %p95
        $region18: #{tpu_custom_call.1} parent=11 // pred_check_branch
          %154 = sbr.rel (%p152) target = $region20
        $region19: #{tpu_custom_call.1} parent=11 // pred_region
          _
        $region20: #{tpu_custom_call.1} parent=11 // pred_fallthru
          _
      $region12: #{tpu_custom_call.1} parent=5 // pred_fallthru
        _
      %p155 = scmp.lt.s32.totalorder %s13, 2
      // Predicated region
      $region21: #{tpu_custom_call.1} parent=5 // pred_check
        %p156 = pneg %p155
      $region22: #{tpu_custom_call.1} parent=5 // pred_check_branch
        %158 = sbr.rel (%p156) target = $region24
      $region23: #{tpu_custom_call.1} parent=5 // pred_region
        // Predicated region
        $region25: #{tpu_custom_call.1} parent=23 // pred_check
          %p159 = pneg %p47
        $region26: #{tpu_custom_call.1} parent=23 // pred_check_branch
          %161 = sbr.rel (%p159) target = $region28
        $region27: #{tpu_custom_call.1} parent=23 // pred_region
          %s162 = sand.u32 %s37, 1
          %s163 = scalar_lea.sflag [#allocation3], %s162
          %s164 = sand.u32 %s37, 1
          %s165 = smul.addr %s164, 16
          %s166 = scalar_lea.vmem [#allocation2], %s165
          %s167 = smul.u32 2, %s21
          %169 = vsyncadd %s163, 0
          %s170 = smul.addr %s20, 4
          %s171 = sadd.s32 %s167, %s170
          %s172 = smul.addr %s171, 4
          %s173 = scalar_lea.hbm %s0, %s172
          %s174 = sshll.u32 %s173, 4
          %s175 = int_to_ptr.hbm [resolvable:$true] %s174
          %s176 = sshll.u32 %s166, 4
          %s177 = int_to_ptr.vmem [resolvable:$true] %s176
          %182 = dma.hbm_to_vmem [thread:$0]  %s175, 256, %s177, %s163, 128, 128, 8
        $region28: #{tpu_custom_call.1} parent=23 // pred_fallthru
          _
      $region24: #{tpu_custom_call.1} parent=5 // pred_fallthru
        _
      %p183 = scmp.le.s32.totalorder 1, %s13
      %p184 = scmp.lt.s32.totalorder %s13, 3
      %p185 = pnand %p183, %p184
      %p186 = pneg %p185
      // Predicated region
      $region29: #{tpu_custom_call.1} parent=5 // pred_check
        _
      $region30: #{tpu_custom_call.1} parent=5 // pred_check_branch
        %188 = sbr.rel (%p185) target = $region32
      $region31: #{tpu_custom_call.1} parent=5 // pred_region
        %s189 = ssub.s32 %s13, 1
        %s190 = sand.u32 %s40, 1
        %s191 = scalar_lea.sflag [#allocation3], %s190
        %s192 = sand.u32 %s40, 1
        %s193 = smul.addr %s192, 16
        %s194 = scalar_lea.vmem [#allocation2], %s193
        // Predicated region
        $region33: #{tpu_custom_call.1} parent=31 // pred_check
          %p195 = pneg %p53
        $region34: #{tpu_custom_call.1} parent=31 // pred_check_branch
          %197 = sbr.rel (%p195) target = $region36
        $region35: #{tpu_custom_call.1} parent=31 // pred_region
          %199 = dma.done %s191, 256
        $region36: #{tpu_custom_call.1} parent=31 // pred_fallthru
          _
        // Predicated region
        $region37: #{tpu_custom_call.1} parent=31 // pred_check
          %p200 = pneg %p74
        $region38: #{tpu_custom_call.1} parent=31 // pred_check_branch
          %202 = sbr.rel (%p200) target = $region40
        $region39: #{tpu_custom_call.1} parent=31 // pred_region
          %204 = dma.done [#allocation5], 128
        $region40: #{tpu_custom_call.1} parent=31 // pred_fallthru
          _
        %s205 = sand.u32 %s40, 1
        %s206 = scalar_lea.sflag [#allocation3], %s205
        %s207 = sand.u32 %s40, 1
        %s208 = smul.addr %s207, 16
        %s209 = scalar_lea.vmem [#allocation2], %s208
        %p210 = pneg %p53
        %p211 = pneg %p50
        %p212 = pneg %p74
        %p213 = pneg %p71
        %p214 = pneg %p95
        %p215 = pneg %p92
        %p216 = pneg %p123
        %p217 = pneg %p120
        %s218 = smul.u32 32, %s23
        %p219 = scmp.lt.s32.totalorder %s22, 1
        %s220 = scalar_select %p219, %s22, 1
        %p221 = scmp.lt.s32.totalorder %s218, 31
        %s222 = scalar_select %p221, %s218, 31
        %s223 = smul.addr %s220, 32
        %s224 = sadd.s32 %s222, %s223
        %s225 = smul.addr %s224, 4
        %s226 = scalar_lea.vmem %s3, %s225
        %s227 = smul.u32 2, %s23
        %s228 = smul.u32 32, %s23
        %p229 = scmp.lt.s32.totalorder %s22, 1
        %s230 = scalar_select %p229, %s22, 1
        %p231 = scmp.lt.s32.totalorder %s228, 31
        %s232 = scalar_select %p231, %s228, 31
        %s233 = smul.addr %s230, 32
        %s234 = sadd.s32 %s232, %s233
        %s235 = smul.addr %s234, 4
        %s236 = scalar_lea.vmem %s3, %s235
        %s237 = smul.u32 32, %s23
        %v239 = vld [vmem:[%s194] sm:$0xff]
        %v240 = vld [vmem:[%s194 + $0x8] sm:$0xff]
        %v241 = vld [vmem:[#allocation4] sm:$0xf]
        %v242 = vld [vmem:[#allocation4 + $0x4] sm:$0xf]
        %v243 = vld [vmem:[%s2] sm:$0x1]
        %v245 = vperm.slane %v243, 0
        %v249 = vunpack.c.l.b16 %v239
        %v250 = vunpack.c.h.b16 %v239
        %v251 = vunpack.c.l.b16 %v240
        %v252 = vunpack.c.h.b16 %v240
        %v253 = vpack.c.b16 %v251, %v249
        %v254 = vpack.c.b16 %v252, %v250
        %257 = vxpose.binary.xlu0.c.b16.start [1/16] %v254, %v253, 128
        %258 = vxpose.binary.xlu0.c.b16.cont [2/16] 0, 0, 128
        %259 = vxpose.binary.xlu0.c.b16.cont [3/16] 0, 0, 128
        %260 = vxpose.binary.xlu0.c.b16.cont [4/16] 0, 0, 128
        %261 = vxpose.binary.xlu0.c.b16.cont [5/16] 0, 0, 128
        %262 = vxpose.binary.xlu0.c.b16.cont [6/16] 0, 0, 128
        %263 = vxpose.binary.xlu0.c.b16.cont [7/16] 0, 0, 128
        %264 = vxpose.binary.xlu0.c.b16.end [8/16] 0, 0, 128
        %v265 = vpop.trf.xlu0
        %v266 = vpop.trf.xlu0
        %v267 = vpop.trf.xlu0
        %v268 = vpop.trf.xlu0
        %v269 = vpop.trf.xlu0
        %v270 = vpop.trf.xlu0
        %v271 = vpop.trf.xlu0
        %v272 = vpop.trf.xlu0
        %v273 = vpop.trf.xlu0
        %v274 = vpop.trf.xlu0
        %v275 = vpop.trf.xlu0
        %v276 = vpop.trf.xlu0
        %v277 = vpop.trf.xlu0
        %v278 = vpop.trf.xlu0
        %v279 = vpop.trf.xlu0
        %v280 = vpop.trf.xlu0
        %v283 = vunpack.c.l.b16 %v241
        %v284 = vunpack.c.l.b16 %v242
        %v285 = vpack.c.b16 %v284, %v283
        %vm287 = vcmask 130048
        %v289 = vsel %vm287, %v265, 0
        %v292 = vsel %vm287, %v267, 0
        %v295 = vsel %vm287, %v269, 0
        %v298 = vsel %vm287, %v271, 0
        %v301 = vsel %vm287, %v273, 0
        %v304 = vsel %vm287, %v275, 0
        %v307 = vsel %vm287, %v277, 0
        %v310 = vsel %vm287, %v279, 0
        %v313 = vsel %vm287, %v266, 0
        %v316 = vsel %vm287, %v268, 0
        %v319 = vsel %vm287, %v270, 0
        %v322 = vsel %vm287, %v272, 0
        %v325 = vsel %vm287, %v274, 0
        %v328 = vsel %vm287, %v276, 0
        %v331 = vsel %vm287, %v278, 0
        %v334 = vsel %vm287, %v280, 0
        %336 = vmatpush.bf16.msra.mxu0 0
        %337 = vmatpush.bf16.msra.mxu0 0
        %338 = vmatpush.bf16.msra.mxu0 0
        %339 = vmatpush.bf16.msra.mxu0 0
        %340 = vmatpush.bf16.msra.mxu0 0
        %341 = vmatpush.bf16.msra.mxu0 0
        %342 = vmatpush.bf16.msra.mxu0 0
        %343 = vmatpush.bf16.msra.mxu0 %v285
        %344 = vmatmul.bf16.gmra.mxu0 %v289
        %v345 = vpop.f32.mrf.mxu0
        %v346 = vadd.f32 %v245, %v345
        %v347 = vpop.f32.mrf.mxu0
        %v348 = vadd.f32 %v245, %v347
        %349 = vmatmul.bf16.gmra.mxu0 %v292
        %v350 = vpop.f32.mrf.mxu0
        %v351 = vadd.f32 %v245, %v350
        %v352 = vpop.f32.mrf.mxu0
        %v353 = vadd.f32 %v245, %v352
        %354 = vmatmul.bf16.gmra.mxu0 %v295
        %v355 = vpop.f32.mrf.mxu0
        %v356 = vadd.f32 %v245, %v355
        %v357 = vpop.f32.mrf.mxu0
        %v358 = vadd.f32 %v245, %v357
        %359 = vmatmul.bf16.gmra.mxu0 %v298
        %v360 = vpop.f32.mrf.mxu0
        %v361 = vadd.f32 %v245, %v360
        %v362 = vpop.f32.mrf.mxu0
        %v363 = vadd.f32 %v245, %v362
        %364 = vmatmul.bf16.gmra.mxu0 %v301
        %v365 = vpop.f32.mrf.mxu0
        %v366 = vadd.f32 %v245, %v365
        %v367 = vpop.f32.mrf.mxu0
        %v368 = vadd.f32 %v245, %v367
        %369 = vmatmul.bf16.gmra.mxu0 %v304
        %v370 = vpop.f32.mrf.mxu0
        %v371 = vadd.f32 %v245, %v370
        %v372 = vpop.f32.mrf.mxu0
        %v373 = vadd.f32 %v245, %v372
        %374 = vmatmul.bf16.gmra.mxu0 %v307
        %v375 = vpop.f32.mrf.mxu0
        %v376 = vadd.f32 %v245, %v375
        %v377 = vpop.f32.mrf.mxu0
        %v378 = vadd.f32 %v245, %v377
        %379 = vmatmul.bf16.gmra.mxu0 %v310
        %v380 = vpop.f32.mrf.mxu0
        %v381 = vadd.f32 %v245, %v380
        %v382 = vpop.f32.mrf.mxu0
        %v383 = vadd.f32 %v245, %v382
        %384 = vmatmul.bf16.gmra.mxu0 %v313
        %v385 = vpop.f32.mrf.mxu0
        %v386 = vadd.f32 %v245, %v385
        %v387 = vpop.f32.mrf.mxu0
        %v388 = vadd.f32 %v245, %v387
        %389 = vmatmul.bf16.gmra.mxu0 %v316
        %v390 = vpop.f32.mrf.mxu0
        %v391 = vadd.f32 %v245, %v390
        %v392 = vpop.f32.mrf.mxu0
        %v393 = vadd.f32 %v245, %v392
        %394 = vmatmul.bf16.gmra.mxu0 %v319
        %v395 = vpop.f32.mrf.mxu0
        %v396 = vadd.f32 %v245, %v395
        %v397 = vpop.f32.mrf.mxu0
        %v398 = vadd.f32 %v245, %v397
        %399 = vmatmul.bf16.gmra.mxu0 %v322
        %v400 = vpop.f32.mrf.mxu0
        %v401 = vadd.f32 %v245, %v400
        %v402 = vpop.f32.mrf.mxu0
        %v403 = vadd.f32 %v245, %v402
        %404 = vmatmul.bf16.gmra.mxu0 %v325
        %v405 = vpop.f32.mrf.mxu0
        %v406 = vadd.f32 %v245, %v405
        %v407 = vpop.f32.mrf.mxu0
        %v408 = vadd.f32 %v245, %v407
        %409 = vmatmul.bf16.gmra.mxu0 %v328
        %v410 = vpop.f32.mrf.mxu0
        %v411 = vadd.f32 %v245, %v410
        %v412 = vpop.f32.mrf.mxu0
        %v413 = vadd.f32 %v245, %v412
        %414 = vmatmul.bf16.gmra.mxu0 %v331
        %v415 = vpop.f32.mrf.mxu0
        %v416 = vadd.f32 %v245, %v415
        %v417 = vpop.f32.mrf.mxu0
        %v418 = vadd.f32 %v245, %v417
        %419 = vmatmul.bf16.gmra.mxu0 %v334
        %v420 = vpop.f32.mrf.mxu0
        %v421 = vadd.f32 %v245, %v420
        %v422 = vpop.f32.mrf.mxu0
        %v423 = vadd.f32 %v245, %v422
        %424 = vdwg.mxu0
        %v425 = vmax.f32 %v346, 0.0
        %v426 = vmax.f32 %v348, 0.0
        %v427 = vmax.f32 %v351, 0.0
        %v428 = vmax.f32 %v353, 0.0
        %v429 = vmax.f32 %v356, 0.0
        %v430 = vmax.f32 %v358, 0.0
        %v431 = vmax.f32 %v361, 0.0
        %v432 = vmax.f32 %v363, 0.0
        %v433 = vmax.f32 %v366, 0.0
        %v434 = vmax.f32 %v368, 0.0
        %v435 = vmax.f32 %v371, 0.0
        %v436 = vmax.f32 %v373, 0.0
        %v437 = vmax.f32 %v376, 0.0
        %v438 = vmax.f32 %v378, 0.0
        %v439 = vmax.f32 %v381, 0.0
        %v440 = vmax.f32 %v383, 0.0
        %v441 = vmax.f32 %v386, 0.0
        %v442 = vmax.f32 %v388, 0.0
        %v443 = vmax.f32 %v391, 0.0
        %v444 = vmax.f32 %v393, 0.0
        %v445 = vmax.f32 %v396, 0.0
        %v446 = vmax.f32 %v398, 0.0
        %v447 = vmax.f32 %v401, 0.0
        %v448 = vmax.f32 %v403, 0.0
        %v449 = vmax.f32 %v406, 0.0
        %v450 = vmax.f32 %v408, 0.0
        %v451 = vmax.f32 %v411, 0.0
        %v452 = vmax.f32 %v413, 0.0
        %v453 = vmax.f32 %v416, 0.0
        %v454 = vmax.f32 %v418, 0.0
        %v455 = vmax.f32 %v421, 0.0
        %v456 = vmax.f32 %v423, 0.0
        %v457 = vpack.c.bf16 %v425, %v425
        %v458 = vpack.c.bf16 %v426, %v426
        %v459 = vpack.c.bf16 %v427, %v427
        %v460 = vpack.c.bf16 %v428, %v428
        %v461 = vpack.c.bf16 %v429, %v429
        %v462 = vpack.c.bf16 %v430, %v430
        %v463 = vpack.c.bf16 %v431, %v431
        %v464 = vpack.c.bf16 %v432, %v432
        %v465 = vpack.c.bf16 %v433, %v433
        %v466 = vpack.c.bf16 %v434, %v434
        %v467 = vpack.c.bf16 %v435, %v435
        %v468 = vpack.c.bf16 %v436, %v436
        %v469 = vpack.c.bf16 %v437, %v437
        %v470 = vpack.c.bf16 %v438, %v438
        %v471 = vpack.c.bf16 %v439, %v439
        %v472 = vpack.c.bf16 %v440, %v440
        %v473 = vpack.c.bf16 %v441, %v441
        %v474 = vpack.c.bf16 %v442, %v442
        %v475 = vpack.c.bf16 %v443, %v443
        %v476 = vpack.c.bf16 %v444, %v444
        %v477 = vpack.c.bf16 %v445, %v445
        %v478 = vpack.c.bf16 %v446, %v446
        %v479 = vpack.c.bf16 %v447, %v447
        %v480 = vpack.c.bf16 %v448, %v448
        %v481 = vpack.c.bf16 %v449, %v449
        %v482 = vpack.c.bf16 %v450, %v450
        %v483 = vpack.c.bf16 %v451, %v451
        %v484 = vpack.c.bf16 %v452, %v452
        %v485 = vpack.c.bf16 %v453, %v453
        %v486 = vpack.c.bf16 %v454, %v454
        %v487 = vpack.c.bf16 %v455, %v455
        %v488 = vpack.c.bf16 %v456, %v456
        %vm489 = vcmask 388096
        %490 = vst.msk [vmem:[%s236] sm:$0xf] %vm489, %v457
        %491 = vst.msk [vmem:[%s236 + $0x4] sm:$0xf] %vm489, %v458
        %492 = vst.msk [vmem:[%s236 + $0x8] sm:$0xf] %vm489, %v459
        %493 = vst.msk [vmem:[%s236 + $0xc] sm:$0xf] %vm489, %v460
        %494 = vst.msk [vmem:[%s236 + $0x10] sm:$0xf] %vm489, %v461
        %495 = vst.msk [vmem:[%s236 + $0x14] sm:$0xf] %vm489, %v462
        %496 = vst.msk [vmem:[%s236 + $0x18] sm:$0xf] %vm489, %v463
        %497 = vst.msk [vmem:[%s236 + $0x1c] sm:$0xf] %vm489, %v464
        %498 = vst.msk [vmem:[%s236 + $0x20] sm:$0xf] %vm489, %v465
        %499 = vst.msk [vmem:[%s236 + $0x24] sm:$0xf] %vm489, %v466
        %500 = vst.msk [vmem:[%s236 + $0x28] sm:$0xf] %vm489, %v467
        %501 = vst.msk [vmem:[%s236 + $0x2c] sm:$0xf] %vm489, %v468
        %502 = vst.msk [vmem:[%s236 + $0x30] sm:$0xf] %vm489, %v469
        %503 = vst.msk [vmem:[%s236 + $0x34] sm:$0xf] %vm489, %v470
        %504 = vst.msk [vmem:[%s236 + $0x38] sm:$0xf] %vm489, %v471
        %505 = vst.msk [vmem:[%s236 + $0x3c] sm:$0xf] %vm489, %v472
        %506 = vst.msk [vmem:[%s236 + $0x40] sm:$0xf] %vm489, %v473
        %507 = vst.msk [vmem:[%s236 + $0x44] sm:$0xf] %vm489, %v474
        %508 = vst.msk [vmem:[%s236 + $0x48] sm:$0xf] %vm489, %v475
        %509 = vst.msk [vmem:[%s236 + $0x4c] sm:$0xf] %vm489, %v476
        %510 = vst.msk [vmem:[%s236 + $0x50] sm:$0xf] %vm489, %v477
        %511 = vst.msk [vmem:[%s236 + $0x54] sm:$0xf] %vm489, %v478
        %512 = vst.msk [vmem:[%s236 + $0x58] sm:$0xf] %vm489, %v479
        %513 = vst.msk [vmem:[%s236 + $0x5c] sm:$0xf] %vm489, %v480
        %514 = vst.msk [vmem:[%s236 + $0x60] sm:$0xf] %vm489, %v481
        %515 = vst.msk [vmem:[%s236 + $0x64] sm:$0xf] %vm489, %v482
        %516 = vst.msk [vmem:[%s236 + $0x68] sm:$0xf] %vm489, %v483
        %517 = vst.msk [vmem:[%s236 + $0x6c] sm:$0xf] %vm489, %v484
        %518 = vst.msk [vmem:[%s236 + $0x70] sm:$0xf] %vm489, %v485
        %519 = vst.msk [vmem:[%s236 + $0x74] sm:$0xf] %vm489, %v486
        %520 = vst.msk [vmem:[%s236 + $0x78] sm:$0xf] %vm489, %v487
        %521 = vst.msk [vmem:[%s236 + $0x7c] sm:$0xf] %vm489, %v488
        %s522 = smul.u32 32, %s23
        %p523 = scmp.lt.s32.totalorder %s22, 1
        %s524 = scalar_select %p523, %s22, 1
        %p525 = scmp.lt.s32.totalorder %s522, 31
        %s526 = scalar_select %p525, %s522, 31
        %s527 = smul.addr %s524, 32
        %s528 = sadd.s32 %s526, %s527
        %s529 = smul.addr %s528, 4
        %s530 = scalar_lea.vmem %s3, %s529
        // Predicated region
        $region41: #{tpu_custom_call.1} parent=31 // pred_check
          %p531 = pneg %p120
        $region42: #{tpu_custom_call.1} parent=31 // pred_check_branch
          %533 = sbr.rel (%p531) target = $region44
        $region43: #{tpu_custom_call.1} parent=31 // pred_region
          %s534 = smul.u32 32, %s23
        $region44: #{tpu_custom_call.1} parent=31 // pred_fallthru
          _
      $region32: #{tpu_custom_call.1} parent=5 // pred_fallthru
        _
      %p535 = scmp.le.s32.totalorder 2, %s13
      // Predicated region
      $region45: #{tpu_custom_call.1} parent=5 // pred_check
        %p536 = pneg %p535
      $region46: #{tpu_custom_call.1} parent=5 // pred_check_branch
        %538 = sbr.rel (%p536) target = $region48
      $region47: #{tpu_custom_call.1} parent=5 // pred_region
        %s539 = ssub.s32 %s13, 2
        // Predicated region
        $region49: #{tpu_custom_call.1} parent=47 // pred_check
          %p540 = pneg %p126
        $region50: #{tpu_custom_call.1} parent=47 // pred_check_branch
          %542 = sbr.rel (%p540) target = $region52
        $region51: #{tpu_custom_call.1} parent=47 // pred_region
          %s543 = smul.u32 32, %s25
          %p544 = scmp.lt.s32.totalorder %s24, 1
          %s545 = scalar_select %p544, %s24, 1
          %p546 = scmp.lt.s32.totalorder %s543, 31
          %s547 = scalar_select %p546, %s543, 31
          %s548 = smul.addr %s545, 32
          %s549 = sadd.s32 %s547, %s548
          %s550 = smul.addr %s549, 4
          %s551 = scalar_lea.vmem %s3, %s550
        $region52: #{tpu_custom_call.1} parent=47 // pred_fallthru
          _
      $region48: #{tpu_custom_call.1} parent=5 // pred_fallthru
        _
    $region6: #{tpu_custom_call.1} parent=1 // loop_footer
      %s17 = sadd.s32 1, %s13
    $region7: #{tpu_custom_call.1} parent=1 // loop_footer_branch
      %12 = sbr.rel target = $region3
    $region8: #{tpu_custom_call.1} parent=1 // loop_exit
      _
    %552 = vsyncpa [#allocation3], 1
    %s553 = scalar_lea.sflag [#allocation3], 1
    %554 = vsyncpa %s553, 1
    %555 = vsyncpa [#allocation5], 1

</llo_original>
